<compile_context>
chip_gen: v7x
topology: tpu7x:2x2x1
jax: 0.10.0
libtpu: 0.0.40
codegen_flags: <defaults>
</compile_context>

<pallas_src>
import functools

import jax
import jax.numpy as jnp
from jax import lax
from jax.experimental import pallas as pl
from jax.experimental.pallas import tpu as pltpu

_EPS = 1e-5  # nn.BatchNorm2d default
_LANE = 128


def h_cnn_kernel(a_ref, w_ref, gamma_ref, beta_ref, o_ref, *, cpad, inv_r, eps):
    # One fused MXU matmul produces both conv outputs side by side along lanes:
    #   lanes [0:cpad)       -> conv1(x) + b1   (value depends only on (n, w))
    #   lanes [cpad:2*cpad)  -> conv2(x) + b2   (value depends only on (n, h))
    # Biases are folded in through the trailing ones-column of A / bias row of W.
    y = jnp.dot(a_ref[...], w_ref[...], preferred_element_type=jnp.float32)  # (R, 2*cpad)

    x1 = y[:, :cpad]        # static lane slices at 128-lane boundaries: no cross-lane work
    x2 = y[:, cpad:]
    prod = x1 * x2          # x2 * x1 broadcast product, one row per (n, h, w)

    # Training-mode BatchNorm over the batch (all R = N*H*W rows) per channel,
    # biased variance, two-pass for numerical stability.
    mean = jnp.sum(prod, axis=0, keepdims=True) * inv_r            # (1, cpad)
    centered = prod - mean
    var = jnp.sum(centered * centered, axis=0, keepdims=True) * inv_r
    scale = gamma_ref[...] * lax.rsqrt(var + eps)                  # (1, cpad)

    # Single whole-ref, lane-dense store.
    o_ref[...] = jnp.maximum(centered * scale + beta_ref[...], 0.0)


def prepare_params(w1, b1, w2, b2, gamma, beta):
    """One-time weight-side layout plumbing (hoisted out of the per-call path)."""
    Cout, Cin, kh, kw1 = w1.shape
    assert (kh, kw1) == (5, 1) and w2.shape[2:] == (1, 4)
    K1, K2 = Cin * 5, Cin * 4
    Cpad = max(_LANE, ((Cout + _LANE - 1) // _LANE) * _LANE)

    w1m = jnp.transpose(w1[:, :, :, 0].reshape(Cout, K1)).astype(jnp.float32)  # (K1, Cout)
    w2m = jnp.transpose(w2[:, :, 0, :].reshape(Cout, K2)).astype(jnp.float32)  # (K2, Cout)

    # Block-diagonal stacked weight (K1+K2+1, 2*Cpad):
    #   rows [0:K1)      x lanes [0:Cout)          = conv1 weights
    #   rows [K1:K1+K2)  x lanes [Cpad:Cpad+Cout)  = conv2 weights
    #   row  K1+K2 (driven by the ones-column of A) = the two biases
    wfull = jnp.zeros((K1 + K2 + 1, 2 * Cpad), jnp.float32)
    wfull = wfull.at[:K1, :Cout].set(w1m)
    wfull = wfull.at[K1:K1 + K2, Cpad:Cpad + Cout].set(w2m)
    wfull = wfull.at[K1 + K2, :Cout].set(b1.astype(jnp.float32))
    wfull = wfull.at[K1 + K2, Cpad:Cpad + Cout].set(b2.astype(jnp.float32))

    pad = ((0, 0), (0, Cpad - Cout))
    g = jnp.pad(gamma.astype(jnp.float32).reshape(1, Cout), pad)
    bt = jnp.pad(beta.astype(jnp.float32).reshape(1, Cout), pad)
    return wfull, g, bt, Cout, Cpad


@functools.partial(jax.jit, static_argnums=(4, 5))
def h_cnn_forward(x, wfull, gamma_pad, beta_pad, Cout, Cpad):
    """x: (N, Cin, 5, 4) NCHW float32 -> (N, Cout, 5, 4) NCHW float32."""
    N, Cin, H, W = x.shape
    assert H == 5 and W == 4, "H_CNN forward requires spatial (5, 4)"
    x = x.astype(jnp.float32)
    R = N * H * W
    K1, K2 = Cin * H, Cin * W

    # im2col: one row per output element (n, h, w); each row carries the conv1
    # features (shared across h), the conv2 features (shared across w) and a 1.0
    # driving the fused bias row of the stacked weight.
    a1 = jnp.transpose(x, (0, 3, 1, 2)).reshape(N, 1, W, K1)        # (ci, kh) features
    a1e = jnp.broadcast_to(a1, (N, H, W, K1))
    a2 = jnp.transpose(x, (0, 2, 1, 3)).reshape(N, H, 1, K2)        # (ci, kw) features
    a2e = jnp.broadcast_to(a2, (N, H, W, K2))
    ones = jnp.ones((N, H, W, 1), jnp.float32)
    a = jnp.concatenate([a1e, a2e, ones], axis=-1).reshape(R, K1 + K2 + 1)

    kernel = functools.partial(h_cnn_kernel, cpad=Cpad, inv_r=1.0 / R, eps=_EPS)
    out2d = pl.pallas_call(
        kernel,
        out_shape=jax.ShapeDtypeStruct((R, Cpad), jnp.float32),
        in_specs=[pl.BlockSpec(memory_space=pltpu.MemorySpace.VMEM)] * 4,
        out_specs=pl.BlockSpec(memory_space=pltpu.MemorySpace.VMEM),
    )(a, wfull, gamma_pad, beta_pad)

    out = out2d[:, :Cout].reshape(N, H, W, Cout)
    # NCHW for exact parity with the PyTorch module (keep the model NHWC to drop this).
    return jnp.transpose(out, (0, 3, 1, 2))


def h_cnn_reference(x, w1, b1, w2, b2, gamma, beta, eps=_EPS):
    """Pure-JAX reference mirroring the PyTorch forward (training-mode BN)."""
    x = x.astype(jnp.float32)
    x1 = jnp.einsum('nchw,och->now', x, w1[:, :, :, 0]) + b1[None, :, None]  # (N,Co,W)
    x2 = jnp.einsum('nchw,ocw->noh', x, w2[:, :, 0, :]) + b2[None, :, None]  # (N,Co,H)
    prod = x2[:, :, :, None] * x1[:, :, None, :]                             # (N,Co,H,W)
    mean = jnp.mean(prod, axis=(0, 2, 3), keepdims=True)
    var = jnp.mean((prod - mean) ** 2, axis=(0, 2, 3), keepdims=True)
    y = (prod - mean) * lax.rsqrt(var + eps)
    y = y * gamma[None, :, None, None] + beta[None, :, None, None]
    return jnp.maximum(y, 0.0)


if __name__ == "__main__":
    N, Cin, Cout, H, W = 2, 4, 8, 5, 4   # spatial (5,4) forced by the module's forward

    key = jax.random.PRNGKey(0)
    kx, kw1, kb1, kw2, kb2 = jax.random.split(key, 5)
    x = jax.random.normal(kx, (N, Cin, H, W), dtype=jnp.float32)
    w1 = 0.1 * jax.random.normal(kw1, (Cout, Cin, 5, 1), dtype=jnp.float32)
    b1 = 0.1 * jax.random.normal(kb1, (Cout,), dtype=jnp.float32)
    w2 = 0.1 * jax.random.normal(kw2, (Cout, Cin, 1, 4), dtype=jnp.float32)
    b2 = 0.1 * jax.random.normal(kb2, (Cout,), dtype=jnp.float32)
    gamma = jnp.ones((Cout,), jnp.float32)   # nn.BatchNorm2d init
    beta = jnp.zeros((Cout,), jnp.float32)
    # TODO(synk): BatchNorm running_mean/running_var buffer updates (training side
    # effect) are not modeled; only the returned activation is reproduced.

    params = prepare_params(w1, b1, w2, b2, gamma, beta)   # one-time weight plumbing
    out = h_cnn_forward(x, *params)
    out = jax.block_until_ready(out)

    ref = h_cnn_reference(x, w1, b1, w2, b2, gamma, beta)
    assert out.shape == (N, Cout, H, W)
    assert jnp.allclose(out, ref, atol=1e-4, rtol=1e-4), (
        float(jnp.max(jnp.abs(out - ref))))
    print("KERNEL_OK")
</pallas_src>

<mosaic_0001>
module attributes {stable_mosaic.version = 11 : i64} {
  func.func @h_cnn_kernel(%arg0: memref<40x37xf32, #tpu.memory_space<vmem>>, %arg1: memref<37x256xf32, #tpu.memory_space<vmem>>, %arg2: memref<1x128xf32, #tpu.memory_space<vmem>>, %arg3: memref<1x128xf32, #tpu.memory_space<vmem>>, %arg4: memref<40x128xf32, #tpu.memory_space<vmem>>) attributes {dimension_semantics = [], scalar_prefetch = 0 : i64, scratch_operands = 0 : i64, tpu.core_type = #tpu.core_type<tc>} {
    %c0 = arith.constant 0 : index
    %c0_0 = arith.constant 0 : index
    %0 = vector.load %arg0[%c0, %c0_0] : memref<40x37xf32, #tpu.memory_space<vmem>>, vector<40x37xf32>
    %c0_1 = arith.constant 0 : index
    %c0_2 = arith.constant 0 : index
    %1 = vector.load %arg1[%c0_1, %c0_2] : memref<37x256xf32, #tpu.memory_space<vmem>>, vector<37x256xf32>
    %cst = arith.constant dense<0.000000e+00> : vector<40x256xf32>
    %2 = tpu.matmul %0, %1, %cst {dimension_numbers = #tpu.dot_dimension_numbers<[1], [0], [0], [1], [0, 0, 1, 1], [], []>} : vector<40x37xf32>, vector<37x256xf32>, vector<40x256xf32> -> vector<40x256xf32>
    %3 = vector.extract_strided_slice %2 {offsets = [0, 0], sizes = [40, 128], strides = [1, 1]} : vector<40x256xf32> to vector<40x128xf32>
    %4 = vector.extract_strided_slice %2 {offsets = [0, 128], sizes = [40, 128], strides = [1, 1]} : vector<40x256xf32> to vector<40x128xf32>
    %5 = arith.mulf %3, %4 : vector<40x128xf32>
    %cst_3 = arith.constant dense<0.000000e+00> : vector<128xf32>
    %6 = vector.multi_reduction <add>, %5, %cst_3 [0] : vector<40x128xf32> to vector<128xf32>
    %7 = vector.shape_cast %6 : vector<128xf32> to vector<1x128xf32>
    %cst_4 = arith.constant 2.500000e-02 : f32
    %8 = vector.broadcast %cst_4 : f32 to vector<1x128xf32>
    %9 = arith.mulf %7, %8 : vector<1x128xf32>
    %10 = vector.broadcast %9 : vector<1x128xf32> to vector<40x128xf32>
    %11 = arith.subf %5, %10 : vector<40x128xf32>
    %12 = arith.mulf %11, %11 : vector<40x128xf32>
    %cst_5 = arith.constant dense<0.000000e+00> : vector<128xf32>
    %13 = vector.multi_reduction <add>, %12, %cst_5 [0] : vector<40x128xf32> to vector<128xf32>
    %14 = vector.shape_cast %13 : vector<128xf32> to vector<1x128xf32>
    %cst_6 = arith.constant 2.500000e-02 : f32
    %15 = vector.broadcast %cst_6 : f32 to vector<1x128xf32>
    %16 = arith.mulf %14, %15 : vector<1x128xf32>
    %c0_7 = arith.constant 0 : index
    %c0_8 = arith.constant 0 : index
    %17 = vector.load %arg2[%c0_7, %c0_8] : memref<1x128xf32, #tpu.memory_space<vmem>>, vector<1x128xf32>
    %cst_9 = arith.constant 9.99999974E-6 : f32
    %18 = vector.broadcast %cst_9 : f32 to vector<1x128xf32>
    %19 = arith.addf %16, %18 : vector<1x128xf32>
    %20 = math.rsqrt %19 : vector<1x128xf32>
    %21 = arith.mulf %17, %20 : vector<1x128xf32>
    %22 = vector.broadcast %21 : vector<1x128xf32> to vector<40x128xf32>
    %23 = arith.mulf %11, %22 : vector<40x128xf32>
    %c0_10 = arith.constant 0 : index
    %c0_11 = arith.constant 0 : index
    %24 = vector.load %arg3[%c0_10, %c0_11] : memref<1x128xf32, #tpu.memory_space<vmem>>, vector<1x128xf32>
    %25 = vector.broadcast %24 : vector<1x128xf32> to vector<40x128xf32>
    %26 = arith.addf %23, %25 : vector<40x128xf32>
    %cst_12 = arith.constant 0.000000e+00 : f32
    %27 = vector.broadcast %cst_12 : f32 to vector<40x128xf32>
    %28 = arith.maximumf %26, %27 : vector<40x128xf32>
    %c0_13 = arith.constant 0 : index
    %c0_14 = arith.constant 0 : index
    %29 = vector.load %arg4[%c0_13, %c0_14] : memref<40x128xf32, #tpu.memory_space<vmem>>, vector<40x128xf32>
    tpu.vector_store %arg4[%c0_13, %c0_14], %28 {strides = array<i32>} : memref<40x128xf32, #tpu.memory_space<vmem>>, vector<40x128xf32>,
    return
  }
}

</mosaic_0001>

<llo_original>
// kernel: h_cnn_forward.1
$region0: #{h_cnn_forward.1}
  #allocation0 [shape = 'u32[]', space=smem, size = 0x4, offset = 0x4, fixed_abs, tag = 'smem constant byte address 0x4 - core index']
  #allocation1 [shape = 'u32[144,128]{1,0:T(1,128)}', space=vmem, size = 0x12000, scoped, tag = 'internal scratch']
  %s0 = inlined_call_operand.vmem [shape: f32[40,37], index: 0, kind: input, shape index: {}]
  %s1 = inlined_call_operand.vmem [shape: f32[37,256], index: 1, kind: input, shape index: {}]
  %s2 = inlined_call_operand.vmem [shape: f32[1,128], index: 2, kind: input, shape index: {}]
  %s3 = inlined_call_operand.vmem [shape: f32[1,128], index: 3, kind: input, shape index: {}]
  %s4 = inlined_call_operand.hbm [shape: f32[40,128], index: 4, kind: output, shape index: {}]
  %s5 = sld [smem:[#allocation0]]
  $region26: #{h_cnn_forward.1} parent=0
    _
  %s7 = ssub.s32 1, %s5
  %s8 = scalar_select 0, %s7, %s5
  $region1: #{h_cnn_forward.1} parent=0
    #allocation2 [shape = 'u8[20480]{0}', space=vmem, size = 0x5000, scoped, tag = 'output window, operand 0, single buffered']
    #allocation3 [shape = 's32[1]{0}', space=sflag, size = 0x4, scoped, tag = 'scoped memory for h_cnn_forward.1']
    %9 = vsyncpa [#allocation3], 0
    // Predicated region
    $region2: #{h_cnn_forward.1} parent=1 // pred_check
      _
    $region3: #{h_cnn_forward.1} parent=1 // pred_check_branch
      %11 = sbr.rel (0) target = $region5
    $region4: #{h_cnn_forward.1} parent=1 // pred_region
      _
    $region5: #{h_cnn_forward.1} parent=1 // pred_fallthru
      _
    // Predicated region
    $region6: #{h_cnn_forward.1} parent=1 // pred_check
      _
    $region7: #{h_cnn_forward.1} parent=1 // pred_check_branch
      %13 = sbr.rel (0) target = $region9
    $region8: #{h_cnn_forward.1} parent=1 // pred_region
      _
    $region9: #{h_cnn_forward.1} parent=1 // pred_fallthru
      _
    // Predicated region
    $region10: #{h_cnn_forward.1} parent=1 // pred_check
      _
    $region11: #{h_cnn_forward.1} parent=1 // pred_check_branch
      %15 = sbr.rel (0) target = $region13
    $region12: #{h_cnn_forward.1} parent=1 // pred_region
      _
    $region13: #{h_cnn_forward.1} parent=1 // pred_fallthru
      _
    // Predicated region
    $region14: #{h_cnn_forward.1} parent=1 // pred_check
      _
    $region15: #{h_cnn_forward.1} parent=1 // pred_check_branch
      %17 = sbr.rel (0) target = $region17
    $region16: #{h_cnn_forward.1} parent=1 // pred_region
      _
    $region17: #{h_cnn_forward.1} parent=1 // pred_fallthru
      _
    %v18 = vld [vmem:[%s0] sm:$0xff]
    %v19 = vld [vmem:[%s0 + $0x8] sm:$0xff]
    %v20 = vld [vmem:[%s0 + $0x10] sm:$0xff]
    %v21 = vld [vmem:[%s0 + $0x18] sm:$0xff]
    %v22 = vld [vmem:[%s0 + $0x20] sm:$0xff]
    %v23 = vld [vmem:[%s1] sm:$0xff]
    %v24 = vld [vmem:[%s1 + $0x8] sm:$0xff]
    %v25 = vld [vmem:[%s1 + $0x10] sm:$0xff]
    %v26 = vld [vmem:[%s1 + $0x18] sm:$0xff]
    %v27 = vld [vmem:[%s1 + $0x20] sm:$0xff]
    %v28 = vld [vmem:[%s1 + $0x28] sm:$0xff]
    %v29 = vld [vmem:[%s1 + $0x30] sm:$0xff]
    %v30 = vld [vmem:[%s1 + $0x38] sm:$0xff]
    %v31 = vld [vmem:[%s1 + $0x40] sm:$0x1f]
    %v32 = vld [vmem:[%s1 + $0x48] sm:$0x1f]
    %vm33 = vcmask 302080
    %v35 = vsel %vm33, %v18, 0
    %v38 = vsel %vm33, %v19, 0
    %v41 = vsel %vm33, %v20, 0
    %v44 = vsel %vm33, %v21, 0
    %v47 = vsel %vm33, %v22, 0
    %vm49 = vcmask 1044480
    %v51 = vsel %vm49, %v31, 0
    %v54 = vsel %vm49, %v32, 0
    %56 = vmatprep.subr.mxu0 %v24
    %57 = vmatpush1.msra.mxu0 %v23
    %58 = vmatprep.subr.mxu0 %v26
    %59 = vmatpush1.msra.mxu0 %v25
    %60 = vmatprep.subr.mxu0 %v28
    %61 = vmatpush1.msra.mxu0 %v27
    %62 = vmatprep.subr.mxu0 %v30
    %63 = vmatpush1.msra.mxu0 %v29
    %64 = vmatprep.subr.mxu0 %v54
    %65 = vmatpush1.msra.mxu0 %v51
    %66 = vmatprep.subr.mxu0 0.0
    %67 = vmatpush1.msra.mxu0 0.0
    %68 = vmatprep.subr.mxu0 0.0
    %69 = vmatpush1.msra.mxu0 0.0
    %70 = vmatprep.subr.mxu0 0.0
    %71 = vmatpush1.msra.mxu0 0.0
    %72 = vmatprep.subr.mxu0 0.0
    %73 = vmatpush1.msra.mxu0 0.0
    %74 = vmatprep.subr.mxu0 0.0
    %75 = vmatpush1.msra.mxu0 0.0
    %76 = vmatprep.subr.mxu0 0.0
    %77 = vmatpush1.msra.mxu0 0.0
    %78 = vmatprep.subr.mxu0 0.0
    %79 = vmatpush1.msra.mxu0 0.0
    %80 = vmatprep.subr.mxu0 0.0
    %81 = vmatpush1.msra.mxu0 0.0
    %82 = vmatprep.subr.mxu0 0.0
    %83 = vmatpush1.msra.mxu0 0.0
    %84 = vmatprep.subr.mxu0 0.0
    %85 = vmatpush1.msra.mxu0 0.0
    %86 = vmatprep.subr.mxu0 0.0
    %87 = vmatpush1.msra.mxu0 0.0
    %88 = vmatprep.subr.mxu0 0.0
    %89 = vmatpush1.msra.mxu0 0.0
    %90 = vmatprep.subr.mxu0 0.0
    %91 = vmatpush1.msra.mxu0 0.0
    %92 = vmatprep.subr.mxu0 0.0
    %93 = vmatpush1.msra.mxu0 0.0
    %94 = vmatprep.subr.mxu0 0.0
    %95 = vmatpush1.msra.mxu0 0.0
    %96 = vmatprep.subr.mxu0 0.0
    %97 = vmatpush1.msra.mxu0 0.0
    %98 = vmatprep.subr.mxu0 0.0
    %99 = vmatpush1.msra.mxu0 0.0
    %100 = vmatprep.subr.mxu0 0.0
    %101 = vmatpush1.msra.mxu0 0.0
    %102 = vmatprep.subr.mxu0 0.0
    %103 = vmatpush1.msra.mxu0 0.0
    %104 = vmatprep.subr.mxu0 0.0
    %105 = vmatpush1.msra.mxu0 0.0
    %106 = vmatprep.subr.mxu0 0.0
    %107 = vmatpush1.msra.mxu0 0.0
    %108 = vmatprep.subr.mxu0 0.0
    %109 = vmatpush1.msra.mxu0 0.0
    %110 = vmatprep.subr.mxu0 0.0
    %111 = vmatpush1.msra.mxu0 0.0
    %112 = vmatprep.subr.mxu0 0.0
    %113 = vmatpush1.msra.mxu0 0.0
    %114 = vmatprep.subr.mxu0 0.0
    %115 = vmatpush1.msra.mxu0 0.0
    %116 = vmatprep.subr.mxu0 0.0
    %117 = vmatpush1.msra.mxu0 0.0
    %118 = vmatprep.subr.mxu0 0.0
    %119 = vmatpush1.msra.mxu0 0.0
    %120 = vmatprep.mubr.f32.mxu0 0.0
    %121 = vmatmul.mubr.f32.gmra.mrb[0].mxu0 %v35
    %v122 = vpop.f32.mrb[0].mxu0
    %v123 = vadd.f32 0.0, %v122
    %v124 = vpop.f32.mrb[0].mxu0
    %v125 = vadd.f32 0.0, %v124
    %126 = vmatprep.mubr.f32.mxu0 0.0
    %127 = vmatmul.mubr.f32.gmra.mrb[0].mxu0 %v38
    %v128 = vpop.f32.mrb[0].mxu0
    %v129 = vadd.f32 0.0, %v128
    %v130 = vpop.f32.mrb[0].mxu0
    %v131 = vadd.f32 0.0, %v130
    %132 = vmatprep.mubr.f32.mxu0 0.0
    %133 = vmatmul.mubr.f32.gmra.mrb[0].mxu0 %v41
    %v134 = vpop.f32.mrb[0].mxu0
    %v135 = vadd.f32 0.0, %v134
    %v136 = vpop.f32.mrb[0].mxu0
    %v137 = vadd.f32 0.0, %v136
    %138 = vmatprep.mubr.f32.mxu0 0.0
    %139 = vmatmul.mubr.f32.gmra.mrb[0].mxu0 %v44
    %v140 = vpop.f32.mrb[0].mxu0
    %v141 = vadd.f32 0.0, %v140
    %v142 = vpop.f32.mrb[0].mxu0
    %v143 = vadd.f32 0.0, %v142
    %144 = vmatprep.mubr.f32.mxu0 0.0
    %145 = vmatmul.mubr.f32.gmra.mrb[0].mxu0 %v47
    %v146 = vpop.f32.mrb[0].mxu0
    %v147 = vadd.f32 0.0, %v146
    %v148 = vpop.f32.mrb[0].mxu0
    %v149 = vadd.f32 0.0, %v148
    %150 = vdwg.mxu0
    %v151 = vmul.f32 %v123, %v125
    %v152 = vmul.f32 %v129, %v131
    %v153 = vmul.f32 %v135, %v137
    %v154 = vmul.f32 %v141, %v143
    %v155 = vmul.f32 %v147, %v149
    %v156 = vadd.f32 %v151, %v152
    %v157 = vadd.f32 %v156, %v153
    %v158 = vadd.f32 %v157, %v154
    %v159 = vadd.f32 %v158, %v155
    %v160 = vrot.slane %v159, 4
    %v161 = vadd.f32 %v159, %v160
    %v162 = vrot.slane %v161, 2
    %v163 = vadd.f32 %v161, %v162
    %v164 = vrot.slane %v163, 1
    %v165 = vadd.f32 %v163, %v164
    %v166 = vmul.f32 %v165, 0.025
    %v167 = vsub.f32 %v151, %v166
    %v168 = vsub.f32 %v152, %v166
    %v169 = vsub.f32 %v153, %v166
    %v170 = vsub.f32 %v154, %v166
    %v171 = vsub.f32 %v155, %v166
    %v172 = vmul.f32 %v167, %v167
    %v173 = vmul.f32 %v168, %v168
    %v174 = vmul.f32 %v169, %v169
    %v175 = vmul.f32 %v170, %v170
    %v176 = vmul.f32 %v171, %v171
    %v177 = vadd.f32 %v172, %v173
    %v178 = vadd.f32 %v177, %v174
    %v179 = vadd.f32 %v178, %v175
    %v180 = vadd.f32 %v179, %v176
    %v181 = vrot.slane %v180, 4
    %v182 = vadd.f32 %v180, %v181
    %v183 = vrot.slane %v182, 2
    %v184 = vadd.f32 %v182, %v183
    %v185 = vrot.slane %v184, 1
    %v186 = vadd.f32 %v184, %v185
    %v187 = vmul.f32 %v186, 0.025
    %v188 = vld [vmem:[%s2] sm:$0x1]
    %v189 = vadd.f32 %v187, 1e-05
    %v190 = vrsqrt.pop %v189
    %v191 = vmul.f32 %v188, %v190
    %v193 = vlaneseq
    %v194 = vshrl.u32 %v193, 7
    %v195 = vsub.s32 0, %v194
    %v196 = vrot.slane %v191, %v195
    %v198 = vmul.f32 %v167, %v196
    %v199 = vmul.f32 %v168, %v196
    %v200 = vmul.f32 %v169, %v196
    %v201 = vmul.f32 %v170, %v196
    %v202 = vmul.f32 %v171, %v196
    %v203 = vld [vmem:[%s3] sm:$0x1]
    %v205 = vlaneseq
    %v206 = vshrl.u32 %v205, 7
    %v207 = vsub.s32 0, %v206
    %v208 = vrot.slane %v203, %v207
    %v210 = vadd.f32 %v198, %v208
    %v211 = vadd.f32 %v199, %v208
    %v212 = vadd.f32 %v200, %v208
    %v213 = vadd.f32 %v201, %v208
    %v214 = vadd.f32 %v202, %v208
    %v215 = vmax.f32 %v210, 0.0
    %v216 = vmax.f32 %v211, 0.0
    %v217 = vmax.f32 %v212, 0.0
    %v218 = vmax.f32 %v213, 0.0
    %v219 = vmax.f32 %v214, 0.0
    %220 = vst [vmem:[#allocation2] sm:$0xff] %v215
    %221 = vst [vmem:[#allocation2 + $0x8] sm:$0xff] %v216
    %222 = vst [vmem:[#allocation2 + $0x10] sm:$0xff] %v217
    %223 = vst [vmem:[#allocation2 + $0x18] sm:$0xff] %v218
    %224 = vst [vmem:[#allocation2 + $0x20] sm:$0xff] %v219
    // Predicated region
    $region18: #{h_cnn_forward.1} parent=1 // pred_check
      _
    $region19: #{h_cnn_forward.1} parent=1 // pred_check_branch
      %226 = sbr.rel (0) target = $region21
    $region20: #{h_cnn_forward.1} parent=1 // pred_region
      %s228 = ssub.s32 640, 640
      %229 = vsyncadd [#allocation3], %s228
      %s230 = sshll.u32 [#allocation2], 4
      %s231 = int_to_ptr.vmem [resolvable:$true] %s230
      %236 = dma.vmem_to_hbm [thread:$0]  %s231, 640, %s4, [#allocation3], 128, 128, 8
    $region21: #{h_cnn_forward.1} parent=1 // pred_fallthru
      _
    // Predicated region
    $region22: #{h_cnn_forward.1} parent=1 // pred_check
      _
    $region23: #{h_cnn_forward.1} parent=1 // pred_check_branch
      %238 = sbr.rel (0) target = $region25
    $region24: #{h_cnn_forward.1} parent=1 // pred_region
      %239 = dma.done [#allocation3], 640
    $region25: #{h_cnn_forward.1} parent=1 // pred_fallthru
      _
    %240 = vsyncpa [#allocation3], 1

</llo_original>
